<compile_context>
chip_gen: v6e
topology: v6e:2x2x1
jax: 0.10.0
libtpu: 0.0.40
codegen_flags: <defaults>
</compile_context>

<pallas_src>
import math

import jax
import jax.numpy as jnp
from jax.experimental import pallas as pl
from jax.experimental.pallas import tpu as pltpu


# --------------------------------------------------------------------------
# Fused kernel: one row-tile of   two_hot @ table  +  move_potentials @ W
# --------------------------------------------------------------------------

def _encoder_kernel(ids_ref, mp_ref, tab_ref, w_ref, o_ref):
    tn = ids_ref.shape[0]
    ids = ids_ref[...]                          # (tn, 2) int32: [:,0]=pos, [:,1]=piece
    pos_ids = ids[:, 0:1]                       # (tn, 1)
    piece_ids = ids[:, 1:2]                     # (tn, 1)

    # "Two-hot" row: position one-hot in lanes 0:64, piece one-hot (shifted by
    # 64) in lanes 64:77.  Exact in f32 (each row has exactly two 1.0s).
    lane = jax.lax.broadcasted_iota(jnp.int32, (tn, 128), 1)
    two_hot = jnp.logical_or(lane == pos_ids,
                             lane == piece_ids + 64).astype(jnp.float32)

    # pos_embed + piece_embed + bias  (bias folded into the piece table rows)
    acc = jnp.dot(two_hot, tab_ref[...], preferred_element_type=jnp.float32)
    # + Linear(64 -> D)(move_potentials)
    acc = acc + jnp.dot(mp_ref[...], w_ref[...],
                        preferred_element_type=jnp.float32)
    o_ref[...] = acc.astype(o_ref.dtype)


def _round_up(x, m):
    return (x + m - 1) // m * m


def chess_piece_encoder(pieces, positions, move_potentials, params, *,
                        tile_n=2048, out_dtype=jnp.float32):
    """pieces, positions: (B, S) int; move_potentials: (B, S, 64) float.
    Returns (B, S, d_model) in out_dtype."""
    B, S = pieces.shape
    D = params["piece_embed"].shape[1]
    n_piece = params["piece_embed"].shape[0]    # 13
    N = B * S

    # One packed id stream: col 0 = position id, col 1 = piece id.
    ids = jnp.stack(
        [positions.reshape(N).astype(jnp.int32),
         pieces.reshape(N).astype(jnp.int32)], axis=-1)            # (N, 2)
    mp = move_potentials.reshape(N, 64).astype(jnp.float32)        # (N, 64)

    # Combined (128, D) embedding table:
    #   rows  0:64   position table
    #   rows 64:77   piece table + Linear bias (fold is exact)
    #   rows 77:128  zeros (never selected by in-range ids)
    piece_rows = params["piece_embed"].astype(jnp.float32) + \
        params["b"].astype(jnp.float32)[None, :]
    tab = jnp.concatenate(
        [params["position_embed"].astype(jnp.float32),
         piece_rows,
         jnp.zeros((128 - 64 - n_piece, D), jnp.float32)], axis=0)  # (128, D)
    w = params["w"].astype(jnp.float32)                             # (64, D)

    # Row tile: multiple of 8 sublanes; big enough to amortize the ~0.35 us
    # per-step overhead, capped so large N keeps >= 8 parallel grid steps
    # (v7x megacore / deep pipelining).
    tn = min(tile_n, _round_up(N, 8))
    if N >= 8 * 512:
        tn = min(tn, max(512, _round_up((N + 7) // 8, 8)))

    grid = (pl.cdiv(N, tn),)
    out = pl.pallas_call(
        _encoder_kernel,
        out_shape=jax.ShapeDtypeStruct((N, D), out_dtype),
        grid=grid,
        in_specs=[
            pl.BlockSpec((tn, 2), lambda i: (i, 0)),      # packed ids
            pl.BlockSpec((tn, 64), lambda i: (i, 0)),     # move_potentials
            pl.BlockSpec((128, D), lambda i: (0, 0)),     # combined embed table
            pl.BlockSpec((64, D), lambda i: (0, 0)),      # linear weight
        ],
        out_specs=pl.BlockSpec((tn, D), lambda i: (i, 0)),
        compiler_params=pltpu.CompilerParams(
            dimension_semantics=("parallel",)),
    )(ids, mp, tab, w)

    return out.reshape(B, S, D)


# --------------------------------------------------------------------------
# Parameters (shapes match the PyTorch module; Linear stored as (in, out))
# --------------------------------------------------------------------------

def init_params(key, d_model):
    k1, k2, k3, k4 = jax.random.split(key, 4)
    piece_embed = jax.random.normal(k1, (13, d_model), jnp.float32)
    position_embed = jax.random.normal(k2, (64, d_model), jnp.float32)
    scale = 1.0 / math.sqrt(64)
    w = jax.random.uniform(k3, (64, d_model), jnp.float32, -scale, scale)
    b = jax.random.uniform(k4, (d_model,), jnp.float32, -scale, scale)
    return {"piece_embed": piece_embed, "position_embed": position_embed,
            "w": w, "b": b}


def reference(pieces, positions, move_potentials, params):
    pe = params["piece_embed"][pieces]
    qe = params["position_embed"][positions]
    mp = jnp.dot(move_potentials, params["w"],
                 precision=jax.lax.Precision.HIGHEST) + params["b"]
    return pe + qe + mp


# --------------------------------------------------------------------------

if __name__ == "__main__":
    d_model = 128      # lane-dense output (multiple of 128)
    B, S = 2, 64       # 64 board squares per position

    key = jax.random.PRNGKey(0)
    kp, k1, k2, k3 = jax.random.split(key, 4)

    params = init_params(kp, d_model)
    pieces = jax.random.randint(k1, (B, S), 0, 13, jnp.int32)
    positions = jnp.broadcast_to(jnp.arange(S, dtype=jnp.int32), (B, S))
    move_potentials = jax.random.normal(k3, (B, S, 64), jnp.float32)

    fwd = jax.jit(chess_piece_encoder)
    out = jax.block_until_ready(fwd(pieces, positions, move_potentials, params))

    ref = reference(pieces, positions, move_potentials, params)
    assert out.shape == (B, S, d_model) and out.dtype == jnp.float32
    assert bool(jnp.all(jnp.isfinite(out)))
    assert bool(jnp.allclose(out, ref, atol=1e-3, rtol=1e-3))
    print("KERNEL_OK")
</pallas_src>

<mosaic_0001>
module attributes {stable_mosaic.version = 11 : i64} {
  func.func @_encoder_kernel(%arg0: i32, %arg1: memref<128x2xi32, #tpu.memory_space<vmem>>, %arg2: memref<128x64xf32, #tpu.memory_space<vmem>>, %arg3: memref<128x128xf32, #tpu.memory_space<vmem>>, %arg4: memref<64x128xf32, #tpu.memory_space<vmem>>, %arg5: memref<128x128xf32, #tpu.memory_space<vmem>>) attributes {dimension_semantics = [#tpu.dimension_semantics<parallel>], iteration_bounds = array<i64: 1>, scalar_prefetch = 0 : i64, scratch_operands = 0 : i64, tpu.core_type = #tpu.core_type<tc>, window_params = [{transform_indices = @transform_0, window_bounds = array<i64: 128, 2>}, {transform_indices = @transform_1, window_bounds = array<i64: 128, 64>}, {pipeline_mode = #tpu.pipeline_mode<synchronous>, transform_indices = @transform_2, window_bounds = array<i64: 128, 128>}, {pipeline_mode = #tpu.pipeline_mode<synchronous>, transform_indices = @transform_3, window_bounds = array<i64: 64, 128>}, {transform_indices = @transform_4, window_bounds = array<i64: 128, 128>}]} {
    %c0 = arith.constant 0 : index
    %c0_0 = arith.constant 0 : index
    %0 = vector.load %arg1[%c0, %c0_0] : memref<128x2xi32, #tpu.memory_space<vmem>>, vector<128x2xi32>
    %1 = vector.extract_strided_slice %0 {offsets = [0, 0], sizes = [128, 1], strides = [1, 1]} : vector<128x2xi32> to vector<128x1xi32>
    %2 = vector.extract_strided_slice %0 {offsets = [0, 1], sizes = [128, 1], strides = [1, 1]} : vector<128x2xi32> to vector<128x1xi32>
    %3 = tpu.iota {dimensions = array<i32: 1>} : vector<128x128xi32>
    %4 = vector.broadcast %1 : vector<128x1xi32> to vector<128x128xi32>
    %5 = arith.cmpi eq, %3, %4 : vector<128x128xi32>
    %c64_i32 = arith.constant 64 : i32
    %6 = vector.broadcast %c64_i32 : i32 to vector<128x1xi32>
    %7 = arith.addi %2, %6 : vector<128x1xi32>
    %8 = vector.broadcast %7 : vector<128x1xi32> to vector<128x128xi32>
    %9 = arith.cmpi eq, %3, %8 : vector<128x128xi32>
    %10 = arith.ori %5, %9 : vector<128x128xi1>
    %11 = arith.extui %10 : vector<128x128xi1> to vector<128x128xi32>
    %12 = arith.sitofp %11 : vector<128x128xi32> to vector<128x128xf32>
    %c0_1 = arith.constant 0 : index
    %c0_2 = arith.constant 0 : index
    %13 = vector.load %arg3[%c0_1, %c0_2] : memref<128x128xf32, #tpu.memory_space<vmem>>, vector<128x128xf32>
    %cst = arith.constant dense<0.000000e+00> : vector<128x128xf32>
    %14 = tpu.matmul %12, %13, %cst {dimension_numbers = #tpu.dot_dimension_numbers<[1], [0], [0], [1], [0, 0, 1, 1], [], []>} : vector<128x128xf32>, vector<128x128xf32>, vector<128x128xf32> -> vector<128x128xf32>
    %c0_3 = arith.constant 0 : index
    %c0_4 = arith.constant 0 : index
    %15 = vector.load %arg2[%c0_3, %c0_4] : memref<128x64xf32, #tpu.memory_space<vmem>>, vector<128x64xf32>
    %c0_5 = arith.constant 0 : index
    %c0_6 = arith.constant 0 : index
    %16 = vector.load %arg4[%c0_5, %c0_6] : memref<64x128xf32, #tpu.memory_space<vmem>>, vector<64x128xf32>
    %cst_7 = arith.constant dense<0.000000e+00> : vector<128x128xf32>
    %17 = tpu.matmul %15, %16, %cst_7 {dimension_numbers = #tpu.dot_dimension_numbers<[1], [0], [0], [1], [0, 0, 1, 1], [], []>} : vector<128x64xf32>, vector<64x128xf32>, vector<128x128xf32> -> vector<128x128xf32>
    %18 = arith.addf %14, %17 : vector<128x128xf32>
    %c0_8 = arith.constant 0 : index
    %c0_9 = arith.constant 0 : index
    %19 = vector.load %arg5[%c0_8, %c0_9] : memref<128x128xf32, #tpu.memory_space<vmem>>, vector<128x128xf32>
    tpu.vector_store %arg5[%c0_8, %c0_9], %18 {strides = array<i32>} : memref<128x128xf32, #tpu.memory_space<vmem>>, vector<128x128xf32>,
    return
  }
  func.func @transform_0(%arg0: i32) -> (i32, i32) {
    %c0_i32 = arith.constant 0 : i32
    %c0_i32_0 = arith.constant 0 : i32
    return %arg0, %c0_i32 : i32, i32
  }
  func.func @transform_1(%arg0: i32) -> (i32, i32) {
    %c0_i32 = arith.constant 0 : i32
    %c0_i32_0 = arith.constant 0 : i32
    return %arg0, %c0_i32 : i32, i32
  }
  func.func @transform_2(%arg0: i32) -> (i32, i32) {
    %c0_i32 = arith.constant 0 : i32
    %c0_i32_0 = arith.constant 0 : i32
    %c0_i32_1 = arith.constant 0 : i32
    return %c0_i32, %c0_i32_0 : i32, i32
  }
  func.func @transform_3(%arg0: i32) -> (i32, i32) {
    %c0_i32 = arith.constant 0 : i32
    %c0_i32_0 = arith.constant 0 : i32
    %c0_i32_1 = arith.constant 0 : i32
    return %c0_i32, %c0_i32_0 : i32, i32
  }
  func.func @transform_4(%arg0: i32) -> (i32, i32) {
    %c0_i32 = arith.constant 0 : i32
    %c0_i32_0 = arith.constant 0 : i32
    return %arg0, %c0_i32 : i32, i32
  }
}

</mosaic_0001>

<llo_original>
// kernel: chess_piece_encoder.1
$region0: #{chess_piece_encoder.1}
  #allocation0 [shape = 'u32[]', space=smem, size = 0x4, offset = 0x4, fixed_abs, tag = 'smem constant byte address 0x4 - core index']
  #allocation1 [shape = 'u32[144,128]{1,0:T(1,128)}', space=vmem, size = 0x12000, scoped, tag = 'internal scratch']
  %s0 = inlined_call_operand.vmem [shape: s32[128,2], index: 0, kind: input, shape index: {}]
  %s1 = inlined_call_operand.vmem [shape: f32[128,64], index: 1, kind: input, shape index: {}]
  %s2 = inlined_call_operand.vmem [shape: f32[128,128], index: 2, kind: input, shape index: {}]
  %s3 = inlined_call_operand.vmem [shape: f32[64,128], index: 3, kind: input, shape index: {}]
  %s4 = inlined_call_operand.hbm [shape: f32[128,128], index: 4, kind: output, shape index: {}]
  %s5 = sld [smem:[#allocation0]]
  $region26: #{chess_piece_encoder.1} parent=0
    _
  %s7 = ssub.s32 1, %s5
  %s8 = scalar_select 0, %s7, %s5
  $region1: #{chess_piece_encoder.1} parent=0
    #allocation2 [shape = 'u8[65536]{0}', space=vmem, size = 0x10000, scoped, tag = 'output window, operand 0, single buffered']
    #allocation3 [shape = 's32[1]{0}', space=sflag, size = 0x4, scoped, tag = 'scoped memory for chess_piece_encoder.1']
    %9 = vsyncpa [#allocation3], 0
    // Predicated region
    $region2: #{chess_piece_encoder.1} parent=1 // pred_check
      _
    $region3: #{chess_piece_encoder.1} parent=1 // pred_check_branch
      %11 = sbr.rel (0) target = $region5
    $region4: #{chess_piece_encoder.1} parent=1 // pred_region
      _
    $region5: #{chess_piece_encoder.1} parent=1 // pred_fallthru
      _
    // Predicated region
    $region6: #{chess_piece_encoder.1} parent=1 // pred_check
      _
    $region7: #{chess_piece_encoder.1} parent=1 // pred_check_branch
      %13 = sbr.rel (0) target = $region9
    $region8: #{chess_piece_encoder.1} parent=1 // pred_region
      _
    $region9: #{chess_piece_encoder.1} parent=1 // pred_fallthru
      _
    // Predicated region
    $region10: #{chess_piece_encoder.1} parent=1 // pred_check
      _
    $region11: #{chess_piece_encoder.1} parent=1 // pred_check_branch
      %15 = sbr.rel (0) target = $region13
    $region12: #{chess_piece_encoder.1} parent=1 // pred_region
      _
    $region13: #{chess_piece_encoder.1} parent=1 // pred_fallthru
      _
    // Predicated region
    $region14: #{chess_piece_encoder.1} parent=1 // pred_check
      _
    $region15: #{chess_piece_encoder.1} parent=1 // pred_check_branch
      %17 = sbr.rel (0) target = $region17
    $region16: #{chess_piece_encoder.1} parent=1 // pred_region
      _
    $region17: #{chess_piece_encoder.1} parent=1 // pred_fallthru
      _
    %v18 = vld [vmem:[%s0] sm:$0xff]
    %v19 = vld [vmem:[%s0 + $0x8] sm:$0xff]
    %v20 = vld [vmem:[%s0 + $0x10] sm:$0xff]
    %v21 = vld [vmem:[%s0 + $0x18] sm:$0xff]
    %v22 = vld [vmem:[%s0 + $0x20] sm:$0xff]
    %v23 = vld [vmem:[%s0 + $0x28] sm:$0xff]
    %v24 = vld [vmem:[%s0 + $0x30] sm:$0xff]
    %v25 = vld [vmem:[%s0 + $0x38] sm:$0xff]
    %v26 = vld [vmem:[%s0 + $0x40] sm:$0xff]
    %v27 = vld [vmem:[%s0 + $0x48] sm:$0xff]
    %v28 = vld [vmem:[%s0 + $0x50] sm:$0xff]
    %v29 = vld [vmem:[%s0 + $0x58] sm:$0xff]
    %v30 = vld [vmem:[%s0 + $0x60] sm:$0xff]
    %v31 = vld [vmem:[%s0 + $0x68] sm:$0xff]
    %v32 = vld [vmem:[%s0 + $0x70] sm:$0xff]
    %v33 = vld [vmem:[%s0 + $0x78] sm:$0xff]
    %v34 = vlaneseq
    %v35 = vand.u32 %v34, 127
    %36 = vset.pattern.permute.xlu0 0
    %37 = vperm.xlu0 %36, %v18
    %v38 = vpop.permute.xlu0 %37
    %39 = vset.pattern.permute.xlu0 0
    %40 = vperm.xlu0 %39, %v19
    %v41 = vpop.permute.xlu0 %40
    %42 = vset.pattern.permute.xlu0 0
    %43 = vperm.xlu0 %42, %v20
    %v44 = vpop.permute.xlu0 %43
    %45 = vset.pattern.permute.xlu0 0
    %46 = vperm.xlu0 %45, %v21
    %v47 = vpop.permute.xlu0 %46
    %48 = vset.pattern.permute.xlu0 0
    %49 = vperm.xlu0 %48, %v22
    %v50 = vpop.permute.xlu0 %49
    %51 = vset.pattern.permute.xlu0 0
    %52 = vperm.xlu0 %51, %v23
    %v53 = vpop.permute.xlu0 %52
    %54 = vset.pattern.permute.xlu0 0
    %55 = vperm.xlu0 %54, %v24
    %v56 = vpop.permute.xlu0 %55
    %57 = vset.pattern.permute.xlu0 0
    %58 = vperm.xlu0 %57, %v25
    %v59 = vpop.permute.xlu0 %58
    %60 = vset.pattern.permute.xlu0 0
    %61 = vperm.xlu0 %60, %v26
    %v62 = vpop.permute.xlu0 %61
    %63 = vset.pattern.permute.xlu0 0
    %64 = vperm.xlu0 %63, %v27
    %v65 = vpop.permute.xlu0 %64
    %66 = vset.pattern.permute.xlu0 0
    %67 = vperm.xlu0 %66, %v28
    %v68 = vpop.permute.xlu0 %67
    %69 = vset.pattern.permute.xlu0 0
    %70 = vperm.xlu0 %69, %v29
    %v71 = vpop.permute.xlu0 %70
    %72 = vset.pattern.permute.xlu0 0
    %73 = vperm.xlu0 %72, %v30
    %v74 = vpop.permute.xlu0 %73
    %75 = vset.pattern.permute.xlu0 0
    %76 = vperm.xlu0 %75, %v31
    %v77 = vpop.permute.xlu0 %76
    %78 = vset.pattern.permute.xlu0 0
    %79 = vperm.xlu0 %78, %v32
    %v80 = vpop.permute.xlu0 %79
    %81 = vset.pattern.permute.xlu0 0
    %82 = vperm.xlu0 %81, %v33
    %v83 = vpop.permute.xlu0 %82
    %vm84 = vcmp.eq.s32.totalorder %v35, %v38
    %vm85 = vcmp.eq.s32.totalorder %v35, %v41
    %vm86 = vcmp.eq.s32.totalorder %v35, %v44
    %vm87 = vcmp.eq.s32.totalorder %v35, %v47
    %vm88 = vcmp.eq.s32.totalorder %v35, %v50
    %vm89 = vcmp.eq.s32.totalorder %v35, %v53
    %vm90 = vcmp.eq.s32.totalorder %v35, %v56
    %vm91 = vcmp.eq.s32.totalorder %v35, %v59
    %vm92 = vcmp.eq.s32.totalorder %v35, %v62
    %vm93 = vcmp.eq.s32.totalorder %v35, %v65
    %vm94 = vcmp.eq.s32.totalorder %v35, %v68
    %vm95 = vcmp.eq.s32.totalorder %v35, %v71
    %vm96 = vcmp.eq.s32.totalorder %v35, %v74
    %vm97 = vcmp.eq.s32.totalorder %v35, %v77
    %vm98 = vcmp.eq.s32.totalorder %v35, %v80
    %vm99 = vcmp.eq.s32.totalorder %v35, %v83
    %v100 = vadd.s32 %v18, 64
    %v101 = vadd.s32 %v19, 64
    %v102 = vadd.s32 %v20, 64
    %v103 = vadd.s32 %v21, 64
    %v104 = vadd.s32 %v22, 64
    %v105 = vadd.s32 %v23, 64
    %v106 = vadd.s32 %v24, 64
    %v107 = vadd.s32 %v25, 64
    %v108 = vadd.s32 %v26, 64
    %v109 = vadd.s32 %v27, 64
    %v110 = vadd.s32 %v28, 64
    %v111 = vadd.s32 %v29, 64
    %v112 = vadd.s32 %v30, 64
    %v113 = vadd.s32 %v31, 64
    %v114 = vadd.s32 %v32, 64
    %v115 = vadd.s32 %v33, 64
    %116 = vset.pattern.permute.xlu0 1
    %117 = vperm.xlu0 %116, %v100
    %v118 = vpop.permute.xlu0 %117
    %119 = vset.pattern.permute.xlu0 1
    %120 = vperm.xlu0 %119, %v101
    %v121 = vpop.permute.xlu0 %120
    %122 = vset.pattern.permute.xlu0 1
    %123 = vperm.xlu0 %122, %v102
    %v124 = vpop.permute.xlu0 %123
    %125 = vset.pattern.permute.xlu0 1
    %126 = vperm.xlu0 %125, %v103
    %v127 = vpop.permute.xlu0 %126
    %128 = vset.pattern.permute.xlu0 1
    %129 = vperm.xlu0 %128, %v104
    %v130 = vpop.permute.xlu0 %129
    %131 = vset.pattern.permute.xlu0 1
    %132 = vperm.xlu0 %131, %v105
    %v133 = vpop.permute.xlu0 %132
    %134 = vset.pattern.permute.xlu0 1
    %135 = vperm.xlu0 %134, %v106
    %v136 = vpop.permute.xlu0 %135
    %137 = vset.pattern.permute.xlu0 1
    %138 = vperm.xlu0 %137, %v107
    %v139 = vpop.permute.xlu0 %138
    %140 = vset.pattern.permute.xlu0 1
    %141 = vperm.xlu0 %140, %v108
    %v142 = vpop.permute.xlu0 %141
    %143 = vset.pattern.permute.xlu0 1
    %144 = vperm.xlu0 %143, %v109
    %v145 = vpop.permute.xlu0 %144
    %146 = vset.pattern.permute.xlu0 1
    %147 = vperm.xlu0 %146, %v110
    %v148 = vpop.permute.xlu0 %147
    %149 = vset.pattern.permute.xlu0 1
    %150 = vperm.xlu0 %149, %v111
    %v151 = vpop.permute.xlu0 %150
    %152 = vset.pattern.permute.xlu0 1
    %153 = vperm.xlu0 %152, %v112
    %v154 = vpop.permute.xlu0 %153
    %155 = vset.pattern.permute.xlu0 1
    %156 = vperm.xlu0 %155, %v113
    %v157 = vpop.permute.xlu0 %156
    %158 = vset.pattern.permute.xlu0 1
    %159 = vperm.xlu0 %158, %v114
    %v160 = vpop.permute.xlu0 %159
    %161 = vset.pattern.permute.xlu0 1
    %162 = vperm.xlu0 %161, %v115
    %v163 = vpop.permute.xlu0 %162
    %vm164 = vcmp.eq.s32.totalorder %v35, %v118
    %vm165 = vcmp.eq.s32.totalorder %v35, %v121
    %vm166 = vcmp.eq.s32.totalorder %v35, %v124
    %vm167 = vcmp.eq.s32.totalorder %v35, %v127
    %vm168 = vcmp.eq.s32.totalorder %v35, %v130
    %vm169 = vcmp.eq.s32.totalorder %v35, %v133
    %vm170 = vcmp.eq.s32.totalorder %v35, %v136
    %vm171 = vcmp.eq.s32.totalorder %v35, %v139
    %vm172 = vcmp.eq.s32.totalorder %v35, %v142
    %vm173 = vcmp.eq.s32.totalorder %v35, %v145
    %vm174 = vcmp.eq.s32.totalorder %v35, %v148
    %vm175 = vcmp.eq.s32.totalorder %v35, %v151
    %vm176 = vcmp.eq.s32.totalorder %v35, %v154
    %vm177 = vcmp.eq.s32.totalorder %v35, %v157
    %vm178 = vcmp.eq.s32.totalorder %v35, %v160
    %vm179 = vcmp.eq.s32.totalorder %v35, %v163
    %vm180 = vmor %vm84, %vm164
    %vm181 = vmor %vm85, %vm165
    %vm182 = vmor %vm86, %vm166
    %vm183 = vmor %vm87, %vm167
    %vm184 = vmor %vm88, %vm168
    %vm185 = vmor %vm89, %vm169
    %vm186 = vmor %vm90, %vm170
    %vm187 = vmor %vm91, %vm171
    %vm188 = vmor %vm92, %vm172
    %vm189 = vmor %vm93, %vm173
    %vm190 = vmor %vm94, %vm174
    %vm191 = vmor %vm95, %vm175
    %vm192 = vmor %vm96, %vm176
    %vm193 = vmor %vm97, %vm177
    %vm194 = vmor %vm98, %vm178
    %vm195 = vmor %vm99, %vm179
    %v196 = vsel %vm180, 1, 0
    %v197 = vsel %vm181, 1, 0
    %v198 = vsel %vm182, 1, 0
    %v199 = vsel %vm183, 1, 0
    %v200 = vsel %vm184, 1, 0
    %v201 = vsel %vm185, 1, 0
    %v202 = vsel %vm186, 1, 0
    %v203 = vsel %vm187, 1, 0
    %v204 = vsel %vm188, 1, 0
    %v205 = vsel %vm189, 1, 0
    %v206 = vsel %vm190, 1, 0
    %v207 = vsel %vm191, 1, 0
    %v208 = vsel %vm192, 1, 0
    %v209 = vsel %vm193, 1, 0
    %v210 = vsel %vm194, 1, 0
    %v211 = vsel %vm195, 1, 0
    %v212 = vcvt.s32.f32 %v196
    %v213 = vcvt.s32.f32 %v197
    %v214 = vcvt.s32.f32 %v198
    %v215 = vcvt.s32.f32 %v199
    %v216 = vcvt.s32.f32 %v200
    %v217 = vcvt.s32.f32 %v201
    %v218 = vcvt.s32.f32 %v202
    %v219 = vcvt.s32.f32 %v203
    %v220 = vcvt.s32.f32 %v204
    %v221 = vcvt.s32.f32 %v205
    %v222 = vcvt.s32.f32 %v206
    %v223 = vcvt.s32.f32 %v207
    %v224 = vcvt.s32.f32 %v208
    %v225 = vcvt.s32.f32 %v209
    %v226 = vcvt.s32.f32 %v210
    %v227 = vcvt.s32.f32 %v211
    %v228 = vld [vmem:[%s2] sm:$0xff]
    %v229 = vld [vmem:[%s2 + $0x8] sm:$0xff]
    %v230 = vld [vmem:[%s2 + $0x10] sm:$0xff]
    %v231 = vld [vmem:[%s2 + $0x18] sm:$0xff]
    %v232 = vld [vmem:[%s2 + $0x20] sm:$0xff]
    %v233 = vld [vmem:[%s2 + $0x28] sm:$0xff]
    %v234 = vld [vmem:[%s2 + $0x30] sm:$0xff]
    %v235 = vld [vmem:[%s2 + $0x38] sm:$0xff]
    %v236 = vld [vmem:[%s2 + $0x40] sm:$0xff]
    %v237 = vld [vmem:[%s2 + $0x48] sm:$0xff]
    %v238 = vld [vmem:[%s2 + $0x50] sm:$0xff]
    %v239 = vld [vmem:[%s2 + $0x58] sm:$0xff]
    %v240 = vld [vmem:[%s2 + $0x60] sm:$0xff]
    %v241 = vld [vmem:[%s2 + $0x68] sm:$0xff]
    %v242 = vld [vmem:[%s2 + $0x70] sm:$0xff]
    %v243 = vld [vmem:[%s2 + $0x78] sm:$0xff]
    %v244 = vld [vmem:[%s1] sm:$0xff]
    %v245 = vld [vmem:[%s1 + $0x8] sm:$0xff]
    %v246 = vld [vmem:[%s1 + $0x10] sm:$0xff]
    %v247 = vld [vmem:[%s1 + $0x18] sm:$0xff]
    %v248 = vld [vmem:[%s1 + $0x20] sm:$0xff]
    %v249 = vld [vmem:[%s1 + $0x28] sm:$0xff]
    %v250 = vld [vmem:[%s1 + $0x30] sm:$0xff]
    %v251 = vld [vmem:[%s1 + $0x38] sm:$0xff]
    %v252 = vld [vmem:[%s1 + $0x40] sm:$0xff]
    %v253 = vld [vmem:[%s1 + $0x48] sm:$0xff]
    %v254 = vld [vmem:[%s1 + $0x50] sm:$0xff]
    %v255 = vld [vmem:[%s1 + $0x58] sm:$0xff]
    %v256 = vld [vmem:[%s1 + $0x60] sm:$0xff]
    %v257 = vld [vmem:[%s1 + $0x68] sm:$0xff]
    %v258 = vld [vmem:[%s1 + $0x70] sm:$0xff]
    %v259 = vld [vmem:[%s1 + $0x78] sm:$0xff]
    %v260 = vld [vmem:[%s3] sm:$0xff]
    %v261 = vld [vmem:[%s3 + $0x8] sm:$0xff]
    %v262 = vld [vmem:[%s3 + $0x10] sm:$0xff]
    %v263 = vld [vmem:[%s3 + $0x18] sm:$0xff]
    %v264 = vld [vmem:[%s3 + $0x20] sm:$0xff]
    %v265 = vld [vmem:[%s3 + $0x28] sm:$0xff]
    %v266 = vld [vmem:[%s3 + $0x30] sm:$0xff]
    %v267 = vld [vmem:[%s3 + $0x38] sm:$0xff]
    %vm268 = vcmask 523264
    %v270 = vsel %vm268, %v244, 0
    %v273 = vsel %vm268, %v245, 0
    %v276 = vsel %vm268, %v246, 0
    %v279 = vsel %vm268, %v247, 0
    %v282 = vsel %vm268, %v248, 0
    %v285 = vsel %vm268, %v249, 0
    %v288 = vsel %vm268, %v250, 0
    %v291 = vsel %vm268, %v251, 0
    %v294 = vsel %vm268, %v252, 0
    %v297 = vsel %vm268, %v253, 0
    %v300 = vsel %vm268, %v254, 0
    %v303 = vsel %vm268, %v255, 0
    %v306 = vsel %vm268, %v256, 0
    %v309 = vsel %vm268, %v257, 0
    %v312 = vsel %vm268, %v258, 0
    %v315 = vsel %vm268, %v259, 0
    %317 = vmatprep.subr.mxu0 0.0
    %318 = vmatpush1.msra.mxu0 0.0
    %319 = vmatprep.subr.mxu0 0.0
    %320 = vmatpush1.msra.mxu0 0.0
    %321 = vmatprep.subr.mxu0 0.0
    %322 = vmatpush1.msra.mxu0 0.0
    %323 = vmatprep.subr.mxu0 0.0
    %324 = vmatpush1.msra.mxu0 0.0
    %325 = vmatprep.subr.mxu0 0.0
    %326 = vmatpush1.msra.mxu0 0.0
    %327 = vmatprep.subr.mxu0 0.0
    %328 = vmatpush1.msra.mxu0 0.0
    %329 = vmatprep.subr.mxu0 0.0
    %330 = vmatpush1.msra.mxu0 0.0
    %331 = vmatprep.subr.mxu0 0.0
    %332 = vmatpush1.msra.mxu0 0.0
    %333 = vmatprep.subr.mxu0 0.0
    %334 = vmatpush1.msra.mxu0 %v267
    %335 = vmatprep.subr.mxu0 0.0
    %336 = vmatpush1.msra.mxu0 %v266
    %337 = vmatprep.subr.mxu0 0.0
    %338 = vmatpush1.msra.mxu0 %v265
    %339 = vmatprep.subr.mxu0 0.0
    %340 = vmatpush1.msra.mxu0 %v264
    %341 = vmatprep.subr.mxu0 0.0
    %342 = vmatpush1.msra.mxu0 %v263
    %343 = vmatprep.subr.mxu0 0.0
    %344 = vmatpush1.msra.mxu0 %v262
    %345 = vmatprep.subr.mxu0 0.0
    %346 = vmatpush1.msra.mxu0 %v261
    %347 = vmatprep.subr.mxu0 0.0
    %348 = vmatpush1.msra.mxu0 %v260
    %349 = vmatprep.subr.mxu0 0.0
    %350 = vmatpush2.msra.mxu0 0.0
    %351 = vmatprep.subr.mxu0 0.0
    %352 = vmatpush2.msra.mxu0 0.0
    %353 = vmatprep.subr.mxu0 0.0
    %354 = vmatpush2.msra.mxu0 0.0
    %355 = vmatprep.subr.mxu0 0.0
    %356 = vmatpush2.msra.mxu0 0.0
    %357 = vmatprep.subr.mxu0 0.0
    %358 = vmatpush2.msra.mxu0 0.0
    %359 = vmatprep.subr.mxu0 0.0
    %360 = vmatpush2.msra.mxu0 0.0
    %361 = vmatprep.subr.mxu0 0.0
    %362 = vmatpush2.msra.mxu0 0.0
    %363 = vmatprep.subr.mxu0 0.0
    %364 = vmatpush2.msra.mxu0 0.0
    %365 = vmatprep.subr.mxu0 0.0
    %366 = vmatpush2.msra.mxu0 0.0
    %367 = vmatprep.subr.mxu0 0.0
    %368 = vmatpush2.msra.mxu0 0.0
    %369 = vmatprep.subr.mxu0 0.0
    %370 = vmatpush2.msra.mxu0 0.0
    %371 = vmatprep.subr.mxu0 0.0
    %372 = vmatpush2.msra.mxu0 0.0
    %373 = vmatprep.subr.mxu0 0.0
    %374 = vmatpush2.msra.mxu0 0.0
    %375 = vmatprep.subr.mxu0 0.0
    %376 = vmatpush2.msra.mxu0 0.0
    %377 = vmatprep.subr.mxu0 0.0
    %378 = vmatpush2.msra.mxu0 0.0
    %379 = vmatprep.subr.mxu0 0.0
    %380 = vmatpush2.msra.mxu0 0.0
    %381 = vmatprep.mubr.f32.mxu0 0.0
    %382 = vmatmul.mubr.f32.gmra.mxu0 %v270
    %v383 = vpop.f32.mrf.mxu0
    %v384 = vadd.f32 0.0, %v383
    %v385 = vpop.f32.mrf.mxu0
    %386 = vmatprep.mubr.f32.mxu0 0.0
    %387 = vmatmul.mubr.f32.gmra.mxu0 %v273
    %v388 = vpop.f32.mrf.mxu0
    %v389 = vadd.f32 0.0, %v388
    %v390 = vpop.f32.mrf.mxu0
    %391 = vmatprep.mubr.f32.mxu0 0.0
    %392 = vmatmul.mubr.f32.gmra.mxu0 %v276
    %v393 = vpop.f32.mrf.mxu0
    %v394 = vadd.f32 0.0, %v393
    %v395 = vpop.f32.mrf.mxu0
    %396 = vmatprep.mubr.f32.mxu0 0.0
    %397 = vmatmul.mubr.f32.gmra.mxu0 %v279
    %v398 = vpop.f32.mrf.mxu0
    %v399 = vadd.f32 0.0, %v398
    %v400 = vpop.f32.mrf.mxu0
    %401 = vmatprep.mubr.f32.mxu0 0.0
    %402 = vmatmul.mubr.f32.gmra.mxu0 %v282
    %v403 = vpop.f32.mrf.mxu0
    %v404 = vadd.f32 0.0, %v403
    %v405 = vpop.f32.mrf.mxu0
    %406 = vmatprep.mubr.f32.mxu0 0.0
    %407 = vmatmul.mubr.f32.gmra.mxu0 %v285
    %v408 = vpop.f32.mrf.mxu0
    %v409 = vadd.f32 0.0, %v408
    %v410 = vpop.f32.mrf.mxu0
    %411 = vmatprep.mubr.f32.mxu0 0.0
    %412 = vmatmul.mubr.f32.gmra.mxu0 %v288
    %v413 = vpop.f32.mrf.mxu0
    %v414 = vadd.f32 0.0, %v413
    %v415 = vpop.f32.mrf.mxu0
    %416 = vmatprep.mubr.f32.mxu0 0.0
    %417 = vmatmul.mubr.f32.gmra.mxu0 %v291
    %v418 = vpop.f32.mrf.mxu0
    %v419 = vadd.f32 0.0, %v418
    %v420 = vpop.f32.mrf.mxu0
    %421 = vmatprep.mubr.f32.mxu0 0.0
    %422 = vmatmul.mubr.f32.gmra.mxu0 %v294
    %v423 = vpop.f32.mrf.mxu0
    %v424 = vadd.f32 0.0, %v423
    %v425 = vpop.f32.mrf.mxu0
    %426 = vmatprep.mubr.f32.mxu0 0.0
    %427 = vmatmul.mubr.f32.gmra.mxu0 %v297
    %v428 = vpop.f32.mrf.mxu0
    %v429 = vadd.f32 0.0, %v428
    %v430 = vpop.f32.mrf.mxu0
    %431 = vmatprep.mubr.f32.mxu0 0.0
    %432 = vmatmul.mubr.f32.gmra.mxu0 %v300
    %v433 = vpop.f32.mrf.mxu0
    %v434 = vadd.f32 0.0, %v433
    %v435 = vpop.f32.mrf.mxu0
    %436 = vmatprep.mubr.f32.mxu0 0.0
    %437 = vmatmul.mubr.f32.gmra.mxu0 %v303
    %v438 = vpop.f32.mrf.mxu0
    %v439 = vadd.f32 0.0, %v438
    %v440 = vpop.f32.mrf.mxu0
    %441 = vmatprep.mubr.f32.mxu0 0.0
    %442 = vmatmul.mubr.f32.gmra.mxu0 %v306
    %v443 = vpop.f32.mrf.mxu0
    %v444 = vadd.f32 0.0, %v443
    %v445 = vpop.f32.mrf.mxu0
    %446 = vmatprep.mubr.f32.mxu0 0.0
    %447 = vmatmul.mubr.f32.gmra.mxu0 %v309
    %v448 = vpop.f32.mrf.mxu0
    %v449 = vadd.f32 0.0, %v448
    %v450 = vpop.f32.mrf.mxu0
    %451 = vmatprep.mubr.f32.mxu0 0.0
    %452 = vmatmul.mubr.f32.gmra.mxu0 %v312
    %v453 = vpop.f32.mrf.mxu0
    %v454 = vadd.f32 0.0, %v453
    %v455 = vpop.f32.mrf.mxu0
    %456 = vmatprep.mubr.f32.mxu0 0.0
    %457 = vmatmul.mubr.f32.gmra.mxu0 %v315
    %v458 = vpop.f32.mrf.mxu0
    %v459 = vadd.f32 0.0, %v458
    %v460 = vpop.f32.mrf.mxu0
    %461 = vdwg.mxu0
    %462 = vmatprep.subr.mxu0 0.0
    %463 = vmatpush1.msra.mxu0 %v243
    %464 = vmatprep.subr.mxu0 0.0
    %465 = vmatpush1.msra.mxu0 %v242
    %466 = vmatprep.subr.mxu0 0.0
    %467 = vmatpush1.msra.mxu0 %v241
    %468 = vmatprep.subr.mxu0 0.0
    %469 = vmatpush1.msra.mxu0 %v240
    %470 = vmatprep.subr.mxu0 0.0
    %471 = vmatpush1.msra.mxu0 %v239
    %472 = vmatprep.subr.mxu0 0.0
    %473 = vmatpush1.msra.mxu0 %v238
    %474 = vmatprep.subr.mxu0 0.0
    %475 = vmatpush1.msra.mxu0 %v237
    %476 = vmatprep.subr.mxu0 0.0
    %477 = vmatpush1.msra.mxu0 %v236
    %478 = vmatprep.subr.mxu0 0.0
    %479 = vmatpush1.msra.mxu0 %v235
    %480 = vmatprep.subr.mxu0 0.0
    %481 = vmatpush1.msra.mxu0 %v234
    %482 = vmatprep.subr.mxu0 0.0
    %483 = vmatpush1.msra.mxu0 %v233
    %484 = vmatprep.subr.mxu0 0.0
    %485 = vmatpush1.msra.mxu0 %v232
    %486 = vmatprep.subr.mxu0 0.0
    %487 = vmatpush1.msra.mxu0 %v231
    %488 = vmatprep.subr.mxu0 0.0
    %489 = vmatpush1.msra.mxu0 %v230
    %490 = vmatprep.subr.mxu0 0.0
    %491 = vmatpush1.msra.mxu0 %v229
    %492 = vmatprep.subr.mxu0 0.0
    %493 = vmatpush1.msra.mxu0 %v228
    %494 = vmatprep.subr.mxu0 0.0
    %495 = vmatpush2.msra.mxu0 0.0
    %496 = vmatprep.subr.mxu0 0.0
    %497 = vmatpush2.msra.mxu0 0.0
    %498 = vmatprep.subr.mxu0 0.0
    %499 = vmatpush2.msra.mxu0 0.0
    %500 = vmatprep.subr.mxu0 0.0
    %501 = vmatpush2.msra.mxu0 0.0
    %502 = vmatprep.subr.mxu0 0.0
    %503 = vmatpush2.msra.mxu0 0.0
    %504 = vmatprep.subr.mxu0 0.0
    %505 = vmatpush2.msra.mxu0 0.0
    %506 = vmatprep.subr.mxu0 0.0
    %507 = vmatpush2.msra.mxu0 0.0
    %508 = vmatprep.subr.mxu0 0.0
    %509 = vmatpush2.msra.mxu0 0.0
    %510 = vmatprep.subr.mxu0 0.0
    %511 = vmatpush2.msra.mxu0 0.0
    %512 = vmatprep.subr.mxu0 0.0
    %513 = vmatpush2.msra.mxu0 0.0
    %514 = vmatprep.subr.mxu0 0.0
    %515 = vmatpush2.msra.mxu0 0.0
    %516 = vmatprep.subr.mxu0 0.0
    %517 = vmatpush2.msra.mxu0 0.0
    %518 = vmatprep.subr.mxu0 0.0
    %519 = vmatpush2.msra.mxu0 0.0
    %520 = vmatprep.subr.mxu0 0.0
    %521 = vmatpush2.msra.mxu0 0.0
    %522 = vmatprep.subr.mxu0 0.0
    %523 = vmatpush2.msra.mxu0 0.0
    %524 = vmatprep.subr.mxu0 0.0
    %525 = vmatpush2.msra.mxu0 0.0
    %526 = vmatprep.mubr.f32.mxu0 0.0
    %527 = vmatmul.mubr.f32.gmra.mxu0 %v212
    %v528 = vpop.f32.mrf.mxu0
    %v529 = vadd.f32 %v384, %v528
    %v530 = vpop.f32.mrf.mxu0
    %531 = vmatprep.mubr.f32.mxu0 0.0
    %532 = vmatmul.mubr.f32.gmra.mxu0 %v213
    %v533 = vpop.f32.mrf.mxu0
    %v534 = vadd.f32 %v389, %v533
    %v535 = vpop.f32.mrf.mxu0
    %536 = vmatprep.mubr.f32.mxu0 0.0
    %537 = vmatmul.mubr.f32.gmra.mxu0 %v214
    %v538 = vpop.f32.mrf.mxu0
    %v539 = vadd.f32 %v394, %v538
    %v540 = vpop.f32.mrf.mxu0
    %541 = vmatprep.mubr.f32.mxu0 0.0
    %542 = vmatmul.mubr.f32.gmra.mxu0 %v215
    %v543 = vpop.f32.mrf.mxu0
    %v544 = vadd.f32 %v399, %v543
    %v545 = vpop.f32.mrf.mxu0
    %546 = vmatprep.mubr.f32.mxu0 0.0
    %547 = vmatmul.mubr.f32.gmra.mxu0 %v216
    %v548 = vpop.f32.mrf.mxu0
    %v549 = vadd.f32 %v404, %v548
    %v550 = vpop.f32.mrf.mxu0
    %551 = vmatprep.mubr.f32.mxu0 0.0
    %552 = vmatmul.mubr.f32.gmra.mxu0 %v217
    %v553 = vpop.f32.mrf.mxu0
    %v554 = vadd.f32 %v409, %v553
    %v555 = vpop.f32.mrf.mxu0
    %556 = vmatprep.mubr.f32.mxu0 0.0
    %557 = vmatmul.mubr.f32.gmra.mxu0 %v218
    %v558 = vpop.f32.mrf.mxu0
    %v559 = vadd.f32 %v414, %v558
    %v560 = vpop.f32.mrf.mxu0
    %561 = vmatprep.mubr.f32.mxu0 0.0
    %562 = vmatmul.mubr.f32.gmra.mxu0 %v219
    %v563 = vpop.f32.mrf.mxu0
    %v564 = vadd.f32 %v419, %v563
    %v565 = vpop.f32.mrf.mxu0
    %566 = vmatprep.mubr.f32.mxu0 0.0
    %567 = vmatmul.mubr.f32.gmra.mxu0 %v220
    %v568 = vpop.f32.mrf.mxu0
    %v569 = vadd.f32 %v424, %v568
    %v570 = vpop.f32.mrf.mxu0
    %571 = vmatprep.mubr.f32.mxu0 0.0
    %572 = vmatmul.mubr.f32.gmra.mxu0 %v221
    %v573 = vpop.f32.mrf.mxu0
    %v574 = vadd.f32 %v429, %v573
    %v575 = vpop.f32.mrf.mxu0
    %576 = vmatprep.mubr.f32.mxu0 0.0
    %577 = vmatmul.mubr.f32.gmra.mxu0 %v222
    %v578 = vpop.f32.mrf.mxu0
    %v579 = vadd.f32 %v434, %v578
    %v580 = vpop.f32.mrf.mxu0
    %581 = vmatprep.mubr.f32.mxu0 0.0
    %582 = vmatmul.mubr.f32.gmra.mxu0 %v223
    %v583 = vpop.f32.mrf.mxu0
    %v584 = vadd.f32 %v439, %v583
    %v585 = vpop.f32.mrf.mxu0
    %586 = vmatprep.mubr.f32.mxu0 0.0
    %587 = vmatmul.mubr.f32.gmra.mxu0 %v224
    %v588 = vpop.f32.mrf.mxu0
    %v589 = vadd.f32 %v444, %v588
    %v590 = vpop.f32.mrf.mxu0
    %591 = vmatprep.mubr.f32.mxu0 0.0
    %592 = vmatmul.mubr.f32.gmra.mxu0 %v225
    %v593 = vpop.f32.mrf.mxu0
    %v594 = vadd.f32 %v449, %v593
    %v595 = vpop.f32.mrf.mxu0
    %596 = vmatprep.mubr.f32.mxu0 0.0
    %597 = vmatmul.mubr.f32.gmra.mxu0 %v226
    %v598 = vpop.f32.mrf.mxu0
    %v599 = vadd.f32 %v454, %v598
    %v600 = vpop.f32.mrf.mxu0
    %601 = vmatprep.mubr.f32.mxu0 0.0
    %602 = vmatmul.mubr.f32.gmra.mxu0 %v227
    %v603 = vpop.f32.mrf.mxu0
    %v604 = vadd.f32 %v459, %v603
    %v605 = vpop.f32.mrf.mxu0
    %606 = vdwg.mxu0
    %607 = vst [vmem:[#allocation2] sm:$0xff] %v529
    %608 = vst [vmem:[#allocation2 + $0x8] sm:$0xff] %v534
    %609 = vst [vmem:[#allocation2 + $0x10] sm:$0xff] %v539
    %610 = vst [vmem:[#allocation2 + $0x18] sm:$0xff] %v544
    %611 = vst [vmem:[#allocation2 + $0x20] sm:$0xff] %v549
    %612 = vst [vmem:[#allocation2 + $0x28] sm:$0xff] %v554
    %613 = vst [vmem:[#allocation2 + $0x30] sm:$0xff] %v559
    %614 = vst [vmem:[#allocation2 + $0x38] sm:$0xff] %v564
    %615 = vst [vmem:[#allocation2 + $0x40] sm:$0xff] %v569
    %616 = vst [vmem:[#allocation2 + $0x48] sm:$0xff] %v574
    %617 = vst [vmem:[#allocation2 + $0x50] sm:$0xff] %v579
    %618 = vst [vmem:[#allocation2 + $0x58] sm:$0xff] %v584
    %619 = vst [vmem:[#allocation2 + $0x60] sm:$0xff] %v589
    %620 = vst [vmem:[#allocation2 + $0x68] sm:$0xff] %v594
    %621 = vst [vmem:[#allocation2 + $0x70] sm:$0xff] %v599
    %622 = vst [vmem:[#allocation2 + $0x78] sm:$0xff] %v604
    // Predicated region
    $region18: #{chess_piece_encoder.1} parent=1 // pred_check
      _
    $region19: #{chess_piece_encoder.1} parent=1 // pred_check_branch
      %624 = sbr.rel (0) target = $region21
    $region20: #{chess_piece_encoder.1} parent=1 // pred_region
      %s626 = ssub.s32 2048, 2048
      %627 = vsyncadd [#allocation3], %s626
      %s628 = sshll.u32 [#allocation2], 4
      %s629 = int_to_ptr.vmem [resolvable:$true] %s628
      %634 = dma.vmem_to_hbm [thread:$0]  %s629, 2048, %s4, [#allocation3], 128, 128, 8
    $region21: #{chess_piece_encoder.1} parent=1 // pred_fallthru
      _
    // Predicated region
    $region22: #{chess_piece_encoder.1} parent=1 // pred_check
      _
    $region23: #{chess_piece_encoder.1} parent=1 // pred_check_branch
      %636 = sbr.rel (0) target = $region25
    $region24: #{chess_piece_encoder.1} parent=1 // pred_region
      %637 = dma.done [#allocation3], 2048
    $region25: #{chess_piece_encoder.1} parent=1 // pred_fallthru
      _
    %638 = vsyncpa [#allocation3], 1

</llo_original>
